<compile_context>
chip_gen: v6e
topology: v6e:2x2x1
jax: 0.10.0
libtpu: 0.0.40
codegen_flags: <defaults>
</compile_context>

<pallas_src>
import functools

import jax
import jax.numpy as jnp
from jax.experimental import pallas as pl
from jax.experimental.pallas import tpu as pltpu


def _round_up(x, m):
    return ((x + m - 1) // m) * m


def _choose_tile_m(M, tile_m):
    """Pick a row-tile size TM.

    Returns the largest multiple of 8 that divides M, is <= tile_m, and (when
    possible) yields an even grid length >= 2 so the "parallel" row axis shards
    across both v7x TensorCores.  Tiles smaller than tile_m/8 are rejected;
    returns None if no suitable divisor exists (caller falls back to padding).
    """
    cap = min((tile_m // 8) * 8, M)
    if cap < 8:
        return None
    floor = max(8, cap // 8)
    best_any = None
    t = cap
    while t >= floor:
        if M % t == 0:
            if best_any is None:
                best_any = t
            if (M // t) % 2 == 0:      # even grid >= 2: dual-TC friendly
                return t
        t -= 8
    return best_any


def _patch_embed_kernel(p_ref, w_ref, b_ref, o_ref):
    # One MXU matmul per row tile (f32 accumulate) + bias add on the VPU.
    acc = jnp.dot(p_ref[...], w_ref[...], preferred_element_type=jnp.float32)
    o_ref[...] = (acc + b_ref[...]).astype(o_ref.dtype)


@functools.partial(jax.jit, static_argnames=("patch_size", "tile_m"))
def patch_embed_forward(x, weight, bias, *, patch_size, tile_m=4096):
    """x: (B, C, H, W). weight: (E, C, p, p). bias: (E,). -> (B, num_patches, E)."""
    if tile_m < 8 or tile_m % 8 != 0:
        raise ValueError(f"tile_m must be a positive multiple of 8, got {tile_m}")

    B, C, H, W = x.shape
    E = weight.shape[0]
    p = patch_size
    Hp, Wp = H // p, W // p
    num_patches = Hp * Wp

    # --- glue: im2col (reshape/transpose, no FLOPs) on the K-wide operand ---
    # (B, C, Hp, p, Wp, p) -> (B, Hp, Wp, C, p, p) -> (B*num_patches, C*p*p)
    patches = x.reshape(B, C, Hp, p, Wp, p)
    patches = patches.transpose(0, 2, 4, 1, 3, 5)
    patches = patches.reshape(B * num_patches, C * p * p)
    M, K = patches.shape

    # Weight as (K, E); flattening order (c, ph, pw) matches the patches layout.
    w2d = weight.reshape(E, K).T
    b2d = bias.reshape(1, E)

    # Row tiling: TM divides M in the common case -> zero-copy around the call.
    TM = _choose_tile_m(M, tile_m)
    pad_rows = 0
    if TM is None:
        # Rare fallback (M has no multiple-of-8 divisor near tile_m): pad rows.
        TM = min((tile_m // 8) * 8, _round_up(M, 8))
        pad_rows = _round_up(M, TM) - M
        patches = jnp.pad(patches, ((0, pad_rows), (0, 0)))
    M_pad = M + pad_rows
    grid = (M_pad // TM,)

    cost = pl.CostEstimate(
        flops=2 * M_pad * K * E,
        transcendentals=0,
        bytes_accessed=4 * (M_pad * K + K * E + E + M_pad * E),
    )

    # VMEM budget (double-buffered; last dims lane-padded to 128 inside VMEM).
    lanes_k = _round_up(K, 128)
    lanes_e = _round_up(E, 128)
    vmem_est = 4 * (2 * TM * lanes_k + 2 * TM * lanes_e + K * lanes_e + lanes_e)
    vmem_limit = int(min(max(32 << 20, (vmem_est * 5) // 4), 64 << 20))

    out = pl.pallas_call(
        _patch_embed_kernel,
        out_shape=jax.ShapeDtypeStruct((M_pad, E), x.dtype),
        grid=grid,
        in_specs=[
            # Streamed row tiles of the patches matrix (contiguous HBM reads).
            pl.BlockSpec((TM, K), lambda i: (i, 0)),
            # Weight / bias: constant block index -> stay resident in VMEM.
            pl.BlockSpec((K, E), lambda i: (0, 0)),
            pl.BlockSpec((1, E), lambda i: (0, 0)),
        ],
        out_specs=pl.BlockSpec((TM, E), lambda i: (i, 0)),
        compiler_params=pltpu.CompilerParams(
            dimension_semantics=("parallel",),   # pure data-parallel row axis
            vmem_limit_bytes=vmem_limit,
        ),
        cost_estimate=cost,
    )(patches, w2d, b2d)

    if pad_rows:
        out = out[:M]  # row-only slice; only on the rare padded fallback path

    # Free reshape (splits the leading dim only): == proj(x).flatten(2).transpose(1, 2)
    return out.reshape(B, num_patches, E)


class PatchEmbedPallas:
    def __init__(self, img_size=32, patch_size=4, in_chans=1, embed_dim=96, key=None):
        self.img_size = (img_size, img_size)
        self.patch_size = patch_size
        self.patches_resolution = [img_size // patch_size, img_size // patch_size]
        self.num_patches = self.patches_resolution[0] * self.patches_resolution[1]
        self.in_chans = in_chans
        self.embed_dim = embed_dim
        # Deterministic synthetic parameters (shapes match nn.Conv2d(in_chans, embed_dim, p, p)).
        key = jax.random.PRNGKey(42) if key is None else key
        kw, kb = jax.random.split(key)
        fan_in = in_chans * patch_size * patch_size
        bound = 1.0 / (fan_in ** 0.5)
        self.weight = jax.random.uniform(
            kw, (embed_dim, in_chans, patch_size, patch_size),
            minval=-bound, maxval=bound, dtype=jnp.float32)
        self.bias = jax.random.uniform(
            kb, (embed_dim,), minval=-bound, maxval=bound, dtype=jnp.float32)
        # norm_layer=None -> nn.Identity(); nothing to do.

    def __call__(self, x, *, tile_m=4096):
        B, C, H, W = x.shape
        assert H == self.img_size[0] and W == self.img_size[1], (
            f"input image size ({H}*{W}) does not match model "
            f"({self.img_size[0]}*{self.img_size[1]}).")
        return patch_embed_forward(x, self.weight, self.bias,
                                   patch_size=self.patch_size, tile_m=tile_m)


def _reference(x, module):
    # Plain-JAX conv (same semantics as torch Conv2d NCHW, stride=kernel=p).
    p = module.patch_size
    ref = jax.lax.conv_general_dilated(
        x, module.weight, window_strides=(p, p), padding="VALID",
        dimension_numbers=("NCHW", "OIHW", "NCHW"))
    ref = ref + module.bias.reshape(1, -1, 1, 1)
    B = x.shape[0]
    return ref.reshape(B, module.embed_dim, -1).transpose(0, 2, 1)


if __name__ == "__main__":
    key = jax.random.PRNGKey(0)
    kx1, kx2, kp1, kp2 = jax.random.split(key, 4)

    # Config 1: module defaults (img_size=32, patch=4, in_chans=1, embed_dim=96).
    B = 2
    x1 = jax.random.normal(kx1, (B, 1, 32, 32), dtype=jnp.float32)
    m1 = PatchEmbedPallas(img_size=32, patch_size=4, in_chans=1, embed_dim=96, key=kp1)
    ref1 = _reference(x1, m1)

    out1 = jax.block_until_ready(m1(x1))                 # default tile -> grid of 2
    assert out1.shape == (B, m1.num_patches, m1.embed_dim), out1.shape
    assert jnp.allclose(out1, ref1, atol=1e-4, rtol=1e-4), \
        float(jnp.max(jnp.abs(out1 - ref1)))

    out1b = jax.block_until_ready(m1(x1, tile_m=32))     # small tile -> 4-step pipeline
    assert jnp.allclose(out1b, ref1, atol=1e-4, rtol=1e-4), \
        float(jnp.max(jnp.abs(out1b - ref1)))

    # Config 2: 3 input channels, lane-full embed_dim (K=48, E=128).
    x2 = jax.random.normal(kx2, (B, 3, 32, 32), dtype=jnp.float32)
    m2 = PatchEmbedPallas(img_size=32, patch_size=4, in_chans=3, embed_dim=128, key=kp2)
    ref2 = _reference(x2, m2)
    out2 = jax.block_until_ready(m2(x2))
    assert out2.shape == (B, m2.num_patches, m2.embed_dim), out2.shape
    assert jnp.allclose(out2, ref2, atol=1e-4, rtol=1e-4), \
        float(jnp.max(jnp.abs(out2 - ref2)))

    print("KERNEL_OK")
</pallas_src>

<mosaic_0001>
module attributes {stable_mosaic.version = 11 : i64} {
  func.func @_patch_embed_kernel(%arg0: i32, %arg1: memref<64x16xf32, #tpu.memory_space<vmem>>, %arg2: memref<16x96xf32, #tpu.memory_space<vmem>>, %arg3: memref<1x96xf32, #tpu.memory_space<vmem>>, %arg4: memref<64x96xf32, #tpu.memory_space<vmem>>) attributes {dimension_semantics = [#tpu.dimension_semantics<parallel>], iteration_bounds = array<i64: 2>, scalar_prefetch = 0 : i64, scratch_operands = 0 : i64, tpu.core_type = #tpu.core_type<tc>, window_params = [{transform_indices = @transform_0, window_bounds = array<i64: 64, 16>}, {pipeline_mode = #tpu.pipeline_mode<synchronous>, transform_indices = @transform_1, window_bounds = array<i64: 16, 96>}, {pipeline_mode = #tpu.pipeline_mode<synchronous>, transform_indices = @transform_2, window_bounds = array<i64: 1, 96>}, {transform_indices = @transform_3, window_bounds = array<i64: 64, 96>}]} {
    %c0 = arith.constant 0 : index
    %c0_0 = arith.constant 0 : index
    %0 = vector.load %arg1[%c0, %c0_0] : memref<64x16xf32, #tpu.memory_space<vmem>>, vector<64x16xf32>
    %c0_1 = arith.constant 0 : index
    %c0_2 = arith.constant 0 : index
    %1 = vector.load %arg2[%c0_1, %c0_2] : memref<16x96xf32, #tpu.memory_space<vmem>>, vector<16x96xf32>
    %cst = arith.constant dense<0.000000e+00> : vector<64x96xf32>
    %2 = tpu.matmul %0, %1, %cst {dimension_numbers = #tpu.dot_dimension_numbers<[1], [0], [0], [1], [0, 0, 1, 1], [], []>} : vector<64x16xf32>, vector<16x96xf32>, vector<64x96xf32> -> vector<64x96xf32>
    %c0_3 = arith.constant 0 : index
    %c0_4 = arith.constant 0 : index
    %3 = vector.load %arg3[%c0_3, %c0_4] : memref<1x96xf32, #tpu.memory_space<vmem>>, vector<1x96xf32>
    %4 = vector.broadcast %3 : vector<1x96xf32> to vector<64x96xf32>
    %5 = arith.addf %2, %4 : vector<64x96xf32>
    %c0_5 = arith.constant 0 : index
    %c0_6 = arith.constant 0 : index
    %6 = vector.load %arg4[%c0_5, %c0_6] : memref<64x96xf32, #tpu.memory_space<vmem>>, vector<64x96xf32>
    tpu.vector_store %arg4[%c0_5, %c0_6], %5 {strides = array<i32>} : memref<64x96xf32, #tpu.memory_space<vmem>>, vector<64x96xf32>,
    return
  }
  func.func @transform_0(%arg0: i32) -> (i32, i32) {
    %c0_i32 = arith.constant 0 : i32
    %c0_i32_0 = arith.constant 0 : i32
    return %arg0, %c0_i32 : i32, i32
  }
  func.func @transform_1(%arg0: i32) -> (i32, i32) {
    %c0_i32 = arith.constant 0 : i32
    %c0_i32_0 = arith.constant 0 : i32
    %c0_i32_1 = arith.constant 0 : i32
    return %c0_i32, %c0_i32_0 : i32, i32
  }
  func.func @transform_2(%arg0: i32) -> (i32, i32) {
    %c0_i32 = arith.constant 0 : i32
    %c0_i32_0 = arith.constant 0 : i32
    %c0_i32_1 = arith.constant 0 : i32
    return %c0_i32, %c0_i32_0 : i32, i32
  }
  func.func @transform_3(%arg0: i32) -> (i32, i32) {
    %c0_i32 = arith.constant 0 : i32
    %c0_i32_0 = arith.constant 0 : i32
    return %arg0, %c0_i32 : i32, i32
  }
}

</mosaic_0001>

<llo_original>
// kernel: patch_embed_forward.1
$region0: #{patch_embed_forward.1}
  #allocation0 [shape = 'u32[]', space=smem, size = 0x4, offset = 0x4, fixed_abs, tag = 'smem constant byte address 0x4 - core index']
  #allocation1 [shape = 'u32[144,128]{1,0:T(1,128)}', space=vmem, size = 0x12000, scoped, tag = 'internal scratch']
  %s0 = inlined_call_operand.vmem [shape: f32[128,16], index: 0, kind: input, shape index: {}]
  %s1 = inlined_call_operand.vmem [shape: f32[16,96], index: 1, kind: input, shape index: {}]
  %s2 = inlined_call_operand.vmem [shape: f32[1,96], index: 2, kind: input, shape index: {}]
  %s3 = inlined_call_operand.hbm [shape: f32[128,96], index: 3, kind: output, shape index: {}]
  %s4 = sld [smem:[#allocation0]]
  $region45: #{patch_embed_forward.1} parent=0
    _
  %s6 = ssub.s32 1, %s4
  %s7 = scalar_select 0, %s6, %s4
  $region1: #{patch_embed_forward.1} parent=0
    #allocation2 [shape = 'u8[65536]{0}', space=vmem, size = 0x10000, scoped, tag = 'output window, operand 0']
    #allocation3 [shape = 's32[2]{0}', space=sflag, size = 0x8, scoped, tag = 'scoped memory for patch_embed_forward.1']
    %8 = vsyncpa [#allocation3], 0
    %s9 = scalar_lea.sflag [#allocation3], 1
    %10 = vsyncpa %s9, 0
    loop: start=0, step=1, limit=4
    $region2: #{patch_embed_forward.1} parent=1 // loop_pre_header
      _
    $region3: #{patch_embed_forward.1} parent=1 // loop_header
      %s12 = sphi 0, %s16
      %p13 = scmp.ge.s32.totalorder %s12, 4
      %s22 = sphi 0, %s24
      %s25 = sphi 0, %s22
      %s26 = sphi 0, %s25
      %s42 = sphi 0, %s26
      %s46 = sphi 0, %s46
      %s48 = sphi 0, %s46
      %s49 = sphi 0, %s48
      %s63 = sphi 0, %s49
      %s67 = sphi 0, %s67
      %s69 = sphi 0, %s67
      %s70 = sphi 0, %s69
      %s84 = sphi 0, %s70
      %s90 = sphi 0, %s92
      %s93 = sphi 0, %s90
      %s94 = sphi 0, %s93
      %s110 = sphi 0, %s94
    $region4: #{patch_embed_forward.1} parent=1 // loop_header_branch
      %15 = sbr.rel (%p13) target = $region8
    $region5: #{patch_embed_forward.1} parent=1 // loop_body
      %s17 = ssub.s32 %s12, 1
      %s18 = ssub.s32 %s12, 2
      %s19 = sadd.s32 %s12, 1
      %s20 = ssub.s32 %s12, %s19
      %p21 = scmp.eq.s32.totalorder %s20, 0
      %s23 = sadd.s32 %s22, 1
      %s24 = scalar_select %p21, %s22, %s23
      %p27 = pneg %p21
      %p28 = scmp.eq.s32.totalorder %s12, 1
      %p29 = por %p27, %p28
      %p30 = scmp.ne.s32.totalorder %s22, %s25
      %p31 = scmp.eq.s32.totalorder %s12, 0
      %p32 = por %p30, %p31
      %p33 = scmp.ne.s32.totalorder %s22, %s25
      %p34 = scmp.eq.s32.totalorder %s17, 1
      %p35 = por %p33, %p34
      %p36 = scmp.ne.s32.totalorder %s25, %s26
      %p37 = scmp.eq.s32.totalorder %s17, 0
      %p38 = por %p36, %p37
      %p39 = scmp.ne.s32.totalorder %s25, %s26
      %p40 = scmp.eq.s32.totalorder %s18, 1
      %p41 = por %p39, %p40
      %p43 = scmp.ne.s32.totalorder %s26, %s42
      %p44 = scmp.eq.s32.totalorder %s18, 0
      %p45 = por %p43, %p44
      %s47 = sadd.s32 %s46, 1
      %p50 = scmp.eq.s32.totalorder %s12, 1
      %p51 = scmp.ne.s32.totalorder %s46, %s48
      %p52 = scmp.eq.s32.totalorder %s12, 0
      %p53 = por %p51, %p52
      %p54 = scmp.ne.s32.totalorder %s46, %s48
      %p55 = scmp.eq.s32.totalorder %s17, 1
      %p56 = por %p54, %p55
      %p57 = scmp.ne.s32.totalorder %s48, %s49
      %p58 = scmp.eq.s32.totalorder %s17, 0
      %p59 = por %p57, %p58
      %p60 = scmp.ne.s32.totalorder %s48, %s49
      %p61 = scmp.eq.s32.totalorder %s18, 1
      %p62 = por %p60, %p61
      %p64 = scmp.ne.s32.totalorder %s49, %s63
      %p65 = scmp.eq.s32.totalorder %s18, 0
      %p66 = por %p64, %p65
      %s68 = sadd.s32 %s67, 1
      %p71 = scmp.eq.s32.totalorder %s12, 1
      %p72 = scmp.ne.s32.totalorder %s67, %s69
      %p73 = scmp.eq.s32.totalorder %s12, 0
      %p74 = por %p72, %p73
      %p75 = scmp.ne.s32.totalorder %s67, %s69
      %p76 = scmp.eq.s32.totalorder %s17, 1
      %p77 = por %p75, %p76
      %p78 = scmp.ne.s32.totalorder %s69, %s70
      %p79 = scmp.eq.s32.totalorder %s17, 0
      %p80 = por %p78, %p79
      %p81 = scmp.ne.s32.totalorder %s69, %s70
      %p82 = scmp.eq.s32.totalorder %s18, 1
      %p83 = por %p81, %p82
      %p85 = scmp.ne.s32.totalorder %s70, %s84
      %p86 = scmp.eq.s32.totalorder %s18, 0
      %p87 = por %p85, %p86
      %s88 = ssub.s32 %s12, %s19
      %p89 = scmp.eq.s32.totalorder %s88, 0
      %s91 = sadd.s32 %s90, 1
      %s92 = scalar_select %p89, %s90, %s91
      %p95 = pneg %p89
      %p96 = scmp.eq.s32.totalorder %s12, 1
      %p97 = por %p95, %p96
      %p98 = scmp.ne.s32.totalorder %s90, %s93
      %p99 = scmp.eq.s32.totalorder %s12, 0
      %p100 = por %p98, %p99
      %p101 = scmp.ne.s32.totalorder %s90, %s93
      %p102 = scmp.eq.s32.totalorder %s17, 1
      %p103 = por %p101, %p102
      %p104 = scmp.ne.s32.totalorder %s93, %s94
      %p105 = scmp.eq.s32.totalorder %s17, 0
      %p106 = por %p104, %p105
      %p107 = scmp.ne.s32.totalorder %s93, %s94
      %p108 = scmp.eq.s32.totalorder %s18, 1
      %p109 = por %p107, %p108
      %p111 = scmp.ne.s32.totalorder %s94, %s110
      %p112 = scmp.eq.s32.totalorder %s18, 0
      %p113 = por %p111, %p112
      %p114 = scmp.le.s32.totalorder 1, %s12
      %p115 = scmp.lt.s32.totalorder %s12, 3
      %p116 = pnand %p114, %p115
      %p117 = pneg %p116
      // Predicated region
      $region9: #{patch_embed_forward.1} parent=5 // pred_check
        _
      $region10: #{patch_embed_forward.1} parent=5 // pred_check_branch
        %119 = sbr.rel (%p116) target = $region12
      $region11: #{patch_embed_forward.1} parent=5 // pred_region
        %s120 = ssub.s32 %s12, 1
        // Predicated region
        $region13: #{patch_embed_forward.1} parent=11 // pred_check
          %p121 = pneg %p59
        $region14: #{patch_embed_forward.1} parent=11 // pred_check_branch
          %123 = sbr.rel (%p121) target = $region16
        $region15: #{patch_embed_forward.1} parent=11 // pred_region
          _
        $region16: #{patch_embed_forward.1} parent=11 // pred_fallthru
          _
        // Predicated region
        $region17: #{patch_embed_forward.1} parent=11 // pred_check
          %p124 = pneg %p80
        $region18: #{patch_embed_forward.1} parent=11 // pred_check_branch
          %126 = sbr.rel (%p124) target = $region20
        $region19: #{patch_embed_forward.1} parent=11 // pred_region
          _
        $region20: #{patch_embed_forward.1} parent=11 // pred_fallthru
          _
      $region12: #{patch_embed_forward.1} parent=5 // pred_fallthru
        _
      %p127 = scmp.lt.s32.totalorder %s12, 2
      // Predicated region
      $region21: #{patch_embed_forward.1} parent=5 // pred_check
        %p128 = pneg %p127
      $region22: #{patch_embed_forward.1} parent=5 // pred_check_branch
        %130 = sbr.rel (%p128) target = $region24
      $region23: #{patch_embed_forward.1} parent=5 // pred_region
        // Predicated region
        $region25: #{patch_embed_forward.1} parent=23 // pred_check
          %p131 = pneg %p32
        $region26: #{patch_embed_forward.1} parent=23 // pred_check_branch
          %133 = sbr.rel (%p131) target = $region28
        $region27: #{patch_embed_forward.1} parent=23 // pred_region
          %s134 = smul.u32 8, %s12
          %p135 = scmp.lt.s32.totalorder %s134, 15
          %s136 = scalar_select %p135, %s134, 15
          %s137 = smul.addr %s136, 8
          %s138 = scalar_lea.vmem %s0, %s137
          %s139 = smul.u32 8, %s12
        $region28: #{patch_embed_forward.1} parent=23 // pred_fallthru
          _
      $region24: #{patch_embed_forward.1} parent=5 // pred_fallthru
        _
      %p140 = scmp.le.s32.totalorder 1, %s12
      %p141 = scmp.lt.s32.totalorder %s12, 3
      %p142 = pnand %p140, %p141
      %p143 = pneg %p142
      // Predicated region
      $region29: #{patch_embed_forward.1} parent=5 // pred_check
        _
      $region30: #{patch_embed_forward.1} parent=5 // pred_check_branch
        %145 = sbr.rel (%p142) target = $region32
      $region31: #{patch_embed_forward.1} parent=5 // pred_region
        %s146 = ssub.s32 %s12, 1
        %s147 = smul.u32 8, %s17
        %p148 = scmp.lt.s32.totalorder %s147, 15
        %s149 = scalar_select %p148, %s147, 15
        %s150 = smul.addr %s149, 8
        %s151 = scalar_lea.vmem %s0, %s150
        %p152 = pneg %p38
        %p153 = pneg %p35
        %p154 = pneg %p59
        %p155 = pneg %p56
        %p156 = pneg %p80
        %p157 = pneg %p77
        %p158 = pneg %p106
        %p159 = pneg %p103
        %s160 = sand.u32 %s93, 1
        %s161 = scalar_lea.sflag [#allocation3], %s160
        %s162 = sand.u32 %s93, 1
        %s163 = smul.addr %s162, 64
        %s164 = scalar_lea.vmem [#allocation2], %s163
        %s165 = smul.u32 8, %s17
        %p166 = scmp.lt.s32.totalorder %s165, 15
        %s167 = scalar_select %p166, %s165, 15
        %s168 = smul.addr %s167, 8
        %s169 = scalar_lea.vmem %s0, %s168
        %s170 = smul.u32 8, %s17
        %s171 = smul.u32 8, %s17
        %v172 = vld [vmem:[%s169] sm:$0xff]
        %v173 = vld [vmem:[%s169 + $0x8] sm:$0xff]
        %v174 = vld [vmem:[%s169 + $0x10] sm:$0xff]
        %v175 = vld [vmem:[%s169 + $0x18] sm:$0xff]
        %v176 = vld [vmem:[%s169 + $0x20] sm:$0xff]
        %v177 = vld [vmem:[%s169 + $0x28] sm:$0xff]
        %v178 = vld [vmem:[%s169 + $0x30] sm:$0xff]
        %v179 = vld [vmem:[%s169 + $0x38] sm:$0xff]
        %v180 = vld [vmem:[%s1] sm:$0xff]
        %v181 = vld [vmem:[%s1 + $0x8] sm:$0xff]
        %v182 = vld [vmem:[%s2] sm:$0x1]
        %v184 = vlaneseq
        %v185 = vshrl.u32 %v184, 7
        %v186 = vsub.s32 0, %v185
        %v187 = vrot.slane %v182, %v186
        %vm189 = vcmask 130048
        %v191 = vsel %vm189, %v172, 0
        %v194 = vsel %vm189, %v173, 0
        %v197 = vsel %vm189, %v174, 0
        %v200 = vsel %vm189, %v175, 0
        %v203 = vsel %vm189, %v176, 0
        %v206 = vsel %vm189, %v177, 0
        %v209 = vsel %vm189, %v178, 0
        %v212 = vsel %vm189, %v179, 0
        %214 = vmatprep.subr.mxu0 0.0
        %215 = vmatpush1.msra.mxu0 0.0
        %216 = vmatprep.subr.mxu0 0.0
        %217 = vmatpush1.msra.mxu0 0.0
        %218 = vmatprep.subr.mxu0 0.0
        %219 = vmatpush1.msra.mxu0 0.0
        %220 = vmatprep.subr.mxu0 0.0
        %221 = vmatpush1.msra.mxu0 0.0
        %222 = vmatprep.subr.mxu0 0.0
        %223 = vmatpush1.msra.mxu0 0.0
        %224 = vmatprep.subr.mxu0 0.0
        %225 = vmatpush1.msra.mxu0 0.0
        %226 = vmatprep.subr.mxu0 0.0
        %227 = vmatpush1.msra.mxu0 0.0
        %228 = vmatprep.subr.mxu0 0.0
        %229 = vmatpush1.msra.mxu0 0.0
        %230 = vmatprep.subr.mxu0 0.0
        %231 = vmatpush1.msra.mxu0 0.0
        %232 = vmatprep.subr.mxu0 0.0
        %233 = vmatpush1.msra.mxu0 0.0
        %234 = vmatprep.subr.mxu0 0.0
        %235 = vmatpush1.msra.mxu0 0.0
        %236 = vmatprep.subr.mxu0 0.0
        %237 = vmatpush1.msra.mxu0 0.0
        %238 = vmatprep.subr.mxu0 0.0
        %239 = vmatpush1.msra.mxu0 0.0
        %240 = vmatprep.subr.mxu0 0.0
        %241 = vmatpush1.msra.mxu0 0.0
        %242 = vmatprep.subr.mxu0 0.0
        %243 = vmatpush1.msra.mxu0 %v181
        %244 = vmatprep.subr.mxu0 0.0
        %245 = vmatpush1.msra.mxu0 %v180
        %246 = vmatprep.subr.mxu0 0.0
        %247 = vmatpush2.msra.mxu0 0.0
        %248 = vmatprep.subr.mxu0 0.0
        %249 = vmatpush2.msra.mxu0 0.0
        %250 = vmatprep.subr.mxu0 0.0
        %251 = vmatpush2.msra.mxu0 0.0
        %252 = vmatprep.subr.mxu0 0.0
        %253 = vmatpush2.msra.mxu0 0.0
        %254 = vmatprep.subr.mxu0 0.0
        %255 = vmatpush2.msra.mxu0 0.0
        %256 = vmatprep.subr.mxu0 0.0
        %257 = vmatpush2.msra.mxu0 0.0
        %258 = vmatprep.subr.mxu0 0.0
        %259 = vmatpush2.msra.mxu0 0.0
        %260 = vmatprep.subr.mxu0 0.0
        %261 = vmatpush2.msra.mxu0 0.0
        %262 = vmatprep.subr.mxu0 0.0
        %263 = vmatpush2.msra.mxu0 0.0
        %264 = vmatprep.subr.mxu0 0.0
        %265 = vmatpush2.msra.mxu0 0.0
        %266 = vmatprep.subr.mxu0 0.0
        %267 = vmatpush2.msra.mxu0 0.0
        %268 = vmatprep.subr.mxu0 0.0
        %269 = vmatpush2.msra.mxu0 0.0
        %270 = vmatprep.subr.mxu0 0.0
        %271 = vmatpush2.msra.mxu0 0.0
        %272 = vmatprep.subr.mxu0 0.0
        %273 = vmatpush2.msra.mxu0 0.0
        %274 = vmatprep.subr.mxu0 0.0
        %275 = vmatpush2.msra.mxu0 0.0
        %276 = vmatprep.subr.mxu0 0.0
        %277 = vmatpush2.msra.mxu0 0.0
        %278 = vmatprep.mubr.f32.mxu0 0.0
        %279 = vmatmul.mubr.f32.gmra.mxu0 %v191
        %v280 = vpop.f32.mrf.mxu0
        %v281 = vadd.f32 %v187, %v280
        %v282 = vpop.f32.mrf.mxu0
        %283 = vmatprep.mubr.f32.mxu0 0.0
        %284 = vmatmul.mubr.f32.gmra.mxu0 %v194
        %v285 = vpop.f32.mrf.mxu0
        %v286 = vadd.f32 %v187, %v285
        %v287 = vpop.f32.mrf.mxu0
        %288 = vmatprep.mubr.f32.mxu0 0.0
        %289 = vmatmul.mubr.f32.gmra.mxu0 %v197
        %v290 = vpop.f32.mrf.mxu0
        %v291 = vadd.f32 %v187, %v290
        %v292 = vpop.f32.mrf.mxu0
        %293 = vmatprep.mubr.f32.mxu0 0.0
        %294 = vmatmul.mubr.f32.gmra.mxu0 %v200
        %v295 = vpop.f32.mrf.mxu0
        %v296 = vadd.f32 %v187, %v295
        %v297 = vpop.f32.mrf.mxu0
        %298 = vmatprep.mubr.f32.mxu0 0.0
        %299 = vmatmul.mubr.f32.gmra.mxu0 %v203
        %v300 = vpop.f32.mrf.mxu0
        %v301 = vadd.f32 %v187, %v300
        %v302 = vpop.f32.mrf.mxu0
        %303 = vmatprep.mubr.f32.mxu0 0.0
        %304 = vmatmul.mubr.f32.gmra.mxu0 %v206
        %v305 = vpop.f32.mrf.mxu0
        %v306 = vadd.f32 %v187, %v305
        %v307 = vpop.f32.mrf.mxu0
        %308 = vmatprep.mubr.f32.mxu0 0.0
        %309 = vmatmul.mubr.f32.gmra.mxu0 %v209
        %v310 = vpop.f32.mrf.mxu0
        %v311 = vadd.f32 %v187, %v310
        %v312 = vpop.f32.mrf.mxu0
        %313 = vmatprep.mubr.f32.mxu0 0.0
        %314 = vmatmul.mubr.f32.gmra.mxu0 %v212
        %v315 = vpop.f32.mrf.mxu0
        %v316 = vadd.f32 %v187, %v315
        %v317 = vpop.f32.mrf.mxu0
        %318 = vdwg.mxu0
        %vm319 = vcmask 785408
        %320 = vst.msk [vmem:[%s164] sm:$0xff] %vm319, %v281
        %321 = vst.msk [vmem:[%s164 + $0x8] sm:$0xff] %vm319, %v286
        %322 = vst.msk [vmem:[%s164 + $0x10] sm:$0xff] %vm319, %v291
        %323 = vst.msk [vmem:[%s164 + $0x18] sm:$0xff] %vm319, %v296
        %324 = vst.msk [vmem:[%s164 + $0x20] sm:$0xff] %vm319, %v301
        %325 = vst.msk [vmem:[%s164 + $0x28] sm:$0xff] %vm319, %v306
        %326 = vst.msk [vmem:[%s164 + $0x30] sm:$0xff] %vm319, %v311
        %327 = vst.msk [vmem:[%s164 + $0x38] sm:$0xff] %vm319, %v316
        %s328 = sand.u32 %s93, 1
        %s329 = scalar_lea.sflag [#allocation3], %s328
        %s330 = sand.u32 %s93, 1
        %s331 = smul.addr %s330, 64
        %s332 = scalar_lea.vmem [#allocation2], %s331
        // Predicated region
        $region33: #{patch_embed_forward.1} parent=31 // pred_check
          %p333 = pneg %p103
        $region34: #{patch_embed_forward.1} parent=31 // pred_check_branch
          %335 = sbr.rel (%p333) target = $region36
        $region35: #{patch_embed_forward.1} parent=31 // pred_region
          %s336 = smul.u32 8, %s17
          %s338 = ssub.s32 1024, 1024
          %339 = vsyncadd %s329, %s338
          %s340 = smul.addr %s336, 128
          %s341 = scalar_lea.hbm %s3, %s340
          %s342 = sshll.u32 %s332, 4
          %s343 = int_to_ptr.vmem [resolvable:$true] %s342
          %348 = dma.vmem_to_hbm [thread:$0]  %s343, 1024, %s341, %s329, 128, 128, 8
        $region36: #{patch_embed_forward.1} parent=31 // pred_fallthru
          _
      $region32: #{patch_embed_forward.1} parent=5 // pred_fallthru
        _
      %p349 = scmp.le.s32.totalorder 2, %s12
      // Predicated region
      $region37: #{patch_embed_forward.1} parent=5 // pred_check
        %p350 = pneg %p349
      $region38: #{patch_embed_forward.1} parent=5 // pred_check_branch
        %352 = sbr.rel (%p350) target = $region40
      $region39: #{patch_embed_forward.1} parent=5 // pred_region
        %s353 = ssub.s32 %s12, 2
        // Predicated region
        $region41: #{patch_embed_forward.1} parent=39 // pred_check
          %p354 = pneg %p109
        $region42: #{patch_embed_forward.1} parent=39 // pred_check_branch
          %356 = sbr.rel (%p354) target = $region44
        $region43: #{patch_embed_forward.1} parent=39 // pred_region
          %s357 = sand.u32 %s94, 1
          %s358 = scalar_lea.sflag [#allocation3], %s357
          %s359 = sand.u32 %s94, 1
          %s360 = smul.addr %s359, 64
          %s361 = scalar_lea.vmem [#allocation2], %s360
          %362 = dma.done %s358, 1024
        $region44: #{patch_embed_forward.1} parent=39 // pred_fallthru
          _
      $region40: #{patch_embed_forward.1} parent=5 // pred_fallthru
        _
    $region6: #{patch_embed_forward.1} parent=1 // loop_footer
      %s16 = sadd.s32 1, %s12
    $region7: #{patch_embed_forward.1} parent=1 // loop_footer_branch
      %11 = sbr.rel target = $region3
    $region8: #{patch_embed_forward.1} parent=1 // loop_exit
      _
    %363 = vsyncpa [#allocation3], 1
    %s364 = scalar_lea.sflag [#allocation3], 1
    %365 = vsyncpa %s364, 1

</llo_original>
